<compile_context>
chip_gen: v7x
topology: tpu7x:2x2x1
jax: 0.10.0
libtpu: 0.0.40
codegen_flags: <defaults>
</compile_context>

<pallas_src>
import functools

import jax
import jax.numpy as jnp
from jax import lax
from jax.experimental import pallas as pl
from jax.experimental.pallas import tpu as pltpu


def _round_up(n, m):
    return ((n + m - 1) // m) * m


def _cdiv(a, b):
    return -(-a // b)


def gate_kernel(*refs, topk, score_func, route_scale, has_sbias):
    if has_sbias:
        x_ref, w_ref, b_ref, sbias_ref, out_ref = refs
    else:
        x_ref, w_ref, b_ref, out_ref = refs
        sbias_ref = None

    # One MXU matmul per token tile in the input dtype, f32 accumulation.
    logits = jnp.dot(x_ref[...], w_ref[...],
                     preferred_element_type=jnp.float32)             # [TM, E]
    logits = logits + b_ref[...].astype(jnp.float32)                 # nn.Linear bias

    TM, E = logits.shape
    eids = lax.broadcasted_iota(jnp.int32, (TM, E), 1)

    if score_func == "softmax":
        # Deferred normalization: rank/gather on unnormalized e = exp(l - m);
        # only the gathered [TM, topk] slab is divided by rowsum at the end.
        m = jnp.max(logits, axis=-1, keepdims=True)
        e = jnp.exp(logits - m)                                       # EUP, in (0, 1]
        denom = jnp.sum(e, axis=-1, keepdims=True)                    # [TM, 1] > 0
        raw = e
        if has_sbias:
            # ordering of (e/denom + sbias) == ordering of (e + sbias*denom)
            work = e + sbias_ref[...].astype(jnp.float32) * denom
        else:
            work = e
    else:
        raw = jax.nn.sigmoid(logits)
        denom = None
        if has_sbias:
            work = raw + sbias_ref[...].astype(jnp.float32)
        else:
            work = raw

    # Iterative top-k, first-occurrence tie-break (matches torch.topk).
    # NOTE: a single packed-key (value|index) reduction per step would halve the
    # XLU work but quantizes the value, risking index mismatches at near-ties;
    # we keep the exact 2-reduction form (the sbias gather is off the serial
    # max -> mask dependence chain).
    idx_cols = []
    val_cols = []
    for _ in range(topk):
        mval = jnp.max(work, axis=-1, keepdims=True)                  # XLU reduce
        hit = work == mval
        idx = jnp.min(jnp.where(hit, eids, E), axis=-1, keepdims=True)  # XLU reduce
        sel = eids == idx
        if has_sbias:
            # gather the un-biased (raw) score at idx; off the serial chain
            val = jnp.sum(jnp.where(sel, raw, 0.0), axis=-1, keepdims=True)
        else:
            val = mval                                                # raw == work
        idx_cols.append(idx)
        val_cols.append(val)
        work = jnp.where(sel, -jnp.inf, work)

    weights = jnp.concatenate(val_cols, axis=-1)                      # [TM, topk] f32
    indices = jnp.concatenate(idx_cols, axis=-1)                      # [TM, topk] i32

    if score_func == "softmax":
        weights = weights / denom            # tiny exact divide on [TM, topk]
    else:
        weights = weights / jnp.sum(weights, axis=-1, keepdims=True)
    weights = weights * route_scale

    # Lane-dense packed output: [TM, 128] int32
    #   lanes [0, topk)     -> f32 routing weights (bit pattern)
    #   lanes [64, 64+topk) -> int32 expert indices
    wbits = pltpu.bitcast(weights.astype(jnp.float32), jnp.int32)
    if topk < 64:
        zpad = jnp.zeros((TM, 64 - topk), jnp.int32)
        packed = jnp.concatenate([wbits, zpad, indices, zpad], axis=-1)
    else:
        packed = jnp.concatenate([wbits, indices], axis=-1)
    out_ref[...] = packed


def prepare_gate_params(weight, bias, extra_bias, *, param_dtype):
    """Once-per-model prep (hoisted out of the per-call path): pre-transpose and
    cast the nn.Linear weight to MXU [D, E] layout, reshape biases to [1, E] f32."""
    w_t = jnp.asarray(weight).T.astype(param_dtype)                   # [D, E]
    b2 = jnp.asarray(bias).reshape(1, -1).astype(jnp.float32)         # [1, E]
    sbias2 = (jnp.asarray(extra_bias).reshape(1, -1).astype(jnp.float32)
              if extra_bias is not None else None)
    return w_t, b2, sbias2


def gate_forward(x, w_t, b2, sbias2, *, topk, score_func, route_scale, tm=None):
    """x: [T, D]; w_t: [D, E] pre-transposed weight (x dtype); b2: [1, E] f32;
    sbias2: [1, E] f32 or None (module has it only when dim == 64).
    Returns ([T, topk] routing weights in x dtype, [T, topk] int32 indices)."""
    T, D = x.shape
    E = w_t.shape[1]
    assert w_t.shape[0] == D
    assert topk <= E, "topk must not exceed the number of experts"
    assert topk <= 64, "packed 128-lane output supports topk <= 64"
    assert score_func in ("softmax", "sigmoid")
    has_sbias = sbias2 is not None

    itemsize = jnp.dtype(x.dtype).itemsize

    # Token tile: target ~1.5 MiB of x per tile (multiple of 8 sublanes).
    if tm is None:
        tm = max(8, min(int((1.5 * 2**20) // max(D * itemsize, 1)), 1024))
        if E >= 256:
            tm = min(tm, 128)      # contain [TM, E] f32 vreg pressure in top-k
    T_k = max(T, 8)
    tm_eff = _round_up(min(tm, _round_up(T_k, 8)), 8)
    # >= 2 grid steps so the "parallel" axis can split across 2 TCs (v7x);
    # one extra step (~0.35 us) is negligible on single-TC v5e/v6e.
    if T_k > 8 and _cdiv(T_k, tm_eff) < 2:
        tm_eff = max(8, _round_up(_cdiv(T_k, 2), 8))
    grid = (_cdiv(T_k, tm_eff),)

    # Only pad when T < 8 (minimum sublane tile); otherwise rely on Pallas
    # ragged-boundary handling -- no full-copy jnp.pad of x.
    x_in = x if T_k == T else jnp.pad(x, ((0, T_k - T), (0, 0)))

    kernel = functools.partial(gate_kernel, topk=topk, score_func=score_func,
                               route_scale=float(route_scale), has_sbias=has_sbias)

    # Single-buffer the grid-invariant weight when it is large (its index_map
    # is constant, so double-buffering only wastes VMEM).
    w_kwargs = {}
    if D * E * itemsize >= 4 * 2**20:
        w_kwargs["pipeline_mode"] = pl.Buffered(1)

    in_specs = [
        pl.BlockSpec((tm_eff, D), lambda i: (i, 0)),            # x tile (streamed)
        pl.BlockSpec((D, E), lambda i: (0, 0), **w_kwargs),     # weight (invariant)
        pl.BlockSpec((1, E), lambda i: (0, 0)),                 # linear bias
    ]
    args = [x_in, w_t, b2]
    if has_sbias:
        in_specs.append(pl.BlockSpec((1, E), lambda i: (0, 0)))  # extra gate bias
        args.append(sbias2)

    # VMEM budget; only raise the scoped limit when needed, capped at ~70% of
    # the physical VMEM of the current generation (v7x has only 64 MiB).
    est = (2 * tm_eff * D * itemsize        # double-buffered x
           + 2 * D * E * itemsize           # weight (worst case double-buffered)
           + 4 * E * 4                      # biases
           + 2 * tm_eff * 128 * 4           # packed output
           + 6 * tm_eff * E * 4)            # f32 score / top-k working set
    vmem_limit = None
    if est > 32 * 2**20:
        try:
            cap = int(0.70 * pltpu.get_tpu_info().vmem_capacity_bytes)
        except Exception:
            cap = 48 * 2**20                # safe on v5e/v6e/v7x
        vmem_limit = max(min(int(est * 1.25), cap), 32 * 2**20)

    packed = pl.pallas_call(
        kernel,
        out_shape=jax.ShapeDtypeStruct((T_k, 128), jnp.int32),
        grid_spec=pltpu.PrefetchScalarGridSpec(
            num_scalar_prefetch=0,
            grid=grid,
            in_specs=in_specs,
            out_specs=pl.BlockSpec((tm_eff, 128), lambda i: (i, 0)),
        ),
        compiler_params=pltpu.CompilerParams(
            dimension_semantics=("parallel",),
            vmem_limit_bytes=vmem_limit),
    )(*args)

    packed = packed[:T]
    weights = lax.bitcast_convert_type(packed[:, :topk], jnp.float32).astype(x.dtype)
    indices = packed[:, 64:64 + topk]
    return weights, indices


def gate_reference(x, weight, bias, extra_bias, *, topk, score_func, route_scale):
    logits = x @ weight.T + bias
    if score_func == "softmax":
        scores = jax.nn.softmax(logits.astype(jnp.float32), axis=-1)
    else:
        scores = jax.nn.sigmoid(logits)
    original = scores
    sel_scores = scores + (extra_bias if extra_bias is not None else 0.0)
    _, indices = lax.top_k(sel_scores, topk)
    weights = jnp.take_along_axis(original, indices, axis=-1)
    if score_func == "sigmoid":
        weights = weights / weights.sum(-1, keepdims=True)
    weights = weights * route_scale
    return weights.astype(x.dtype), indices.astype(jnp.int32)


def _run_case(key, *, T, D, E, topk, score_func, route_scale, with_extra_bias):
    kx, kw, kb, ks = jax.random.split(key, 4)
    x = jax.random.normal(kx, (T, D), dtype=jnp.float32)
    weight = jax.random.normal(kw, (E, D), dtype=jnp.float32) * 0.1   # nn.Linear weight [E, D]
    bias = jax.random.normal(kb, (E,), dtype=jnp.float32) * 0.1       # nn.Linear bias
    extra_bias = (jax.random.normal(ks, (E,), dtype=jnp.float32) * 0.05
                  if with_extra_bias else None)

    w_t, b2, sbias2 = prepare_gate_params(weight, bias, extra_bias, param_dtype=x.dtype)
    w_out, i_out = gate_forward(x, w_t, b2, sbias2, topk=topk,
                                score_func=score_func, route_scale=route_scale)
    jax.block_until_ready((w_out, i_out))

    ref_w, ref_i = gate_reference(x, weight, bias, extra_bias,
                                  topk=topk, score_func=score_func,
                                  route_scale=route_scale)

    assert w_out.shape == (T, topk) and i_out.shape == (T, topk)
    assert jnp.all(i_out == ref_i), "expert indices mismatch"
    assert jnp.allclose(w_out, ref_w, atol=1e-5, rtol=1e-5), "routing weights mismatch"


if __name__ == "__main__":
    key = jax.random.PRNGKey(0)
    k1, k2 = jax.random.split(key)

    # Case 1: dim != 64 -> no extra gate bias, softmax scoring.
    _run_case(k1, T=16, D=32, E=8, topk=2,
              score_func="softmax", route_scale=2.0, with_extra_bias=False)

    # Case 2: dim == 64 path (extra gate bias present), sigmoid scoring,
    # T not a multiple of the tile to exercise the ragged (un-padded) boundary.
    _run_case(k2, T=20, D=64, E=16, topk=4,
              score_func="sigmoid", route_scale=1.0, with_extra_bias=True)

    # TODO(synk): score_history logging / matplotlib plotting from the module is
    # host-side training instrumentation and is intentionally not implemented.
    print("KERNEL_OK")
</pallas_src>

<mosaic_0001>
module attributes {stable_mosaic.version = 11 : i64} {
  func.func @gate_kernel(%arg0: i32, %arg1: memref<8x32xf32, #tpu.memory_space<vmem>>, %arg2: memref<32x8xf32, #tpu.memory_space<vmem>>, %arg3: memref<1x8xf32, #tpu.memory_space<vmem>>, %arg4: memref<8x128xi32, #tpu.memory_space<vmem>>) attributes {dimension_semantics = [#tpu.dimension_semantics<parallel>], iteration_bounds = array<i64: 2>, scalar_prefetch = 0 : i64, scratch_operands = 0 : i64, tpu.core_type = #tpu.core_type<tc>, window_params = [{transform_indices = @transform_0, window_bounds = array<i64: 8, 32>}, {pipeline_mode = #tpu.pipeline_mode<synchronous>, transform_indices = @transform_1, window_bounds = array<i64: 32, 8>}, {pipeline_mode = #tpu.pipeline_mode<synchronous>, transform_indices = @transform_2, window_bounds = array<i64: 1, 8>}, {transform_indices = @transform_3, window_bounds = array<i64: 8, 128>}]} {
    %c0 = arith.constant 0 : index
    %c0_0 = arith.constant 0 : index
    %0 = vector.load %arg1[%c0, %c0_0] : memref<8x32xf32, #tpu.memory_space<vmem>>, vector<8x32xf32>
    %c0_1 = arith.constant 0 : index
    %c0_2 = arith.constant 0 : index
    %1 = vector.load %arg2[%c0_1, %c0_2] : memref<32x8xf32, #tpu.memory_space<vmem>>, vector<32x8xf32>
    %cst = arith.constant dense<0.000000e+00> : vector<8x8xf32>
    %2 = tpu.matmul %0, %1, %cst {dimension_numbers = #tpu.dot_dimension_numbers<[1], [0], [0], [1], [0, 0, 1, 1], [], []>} : vector<8x32xf32>, vector<32x8xf32>, vector<8x8xf32> -> vector<8x8xf32>
    %c0_3 = arith.constant 0 : index
    %c0_4 = arith.constant 0 : index
    %3 = vector.load %arg3[%c0_3, %c0_4] : memref<1x8xf32, #tpu.memory_space<vmem>>, vector<1x8xf32>
    %4 = vector.broadcast %3 : vector<1x8xf32> to vector<8x8xf32>
    %5 = arith.addf %2, %4 : vector<8x8xf32>
    %6 = tpu.iota {dimensions = array<i32: 1>} : vector<8x8xi32>
    %cst_5 = arith.constant dense<0xFF800000> : vector<8xf32>
    %7 = vector.multi_reduction <maximumf>, %5, %cst_5 [1] : vector<8x8xf32> to vector<8xf32>
    %8 = vector.shape_cast %7 : vector<8xf32> to vector<8x1xf32>
    %9 = vector.broadcast %8 : vector<8x1xf32> to vector<8x8xf32>
    %10 = arith.subf %5, %9 : vector<8x8xf32>
    %11 = math.exp %10 : vector<8x8xf32>
    %cst_6 = arith.constant dense<0.000000e+00> : vector<8xf32>
    %12 = vector.multi_reduction <add>, %11, %cst_6 [1] : vector<8x8xf32> to vector<8xf32>
    %13 = vector.shape_cast %12 : vector<8xf32> to vector<8x1xf32>
    %cst_7 = arith.constant dense<0xFF800000> : vector<8xf32>
    %14 = vector.multi_reduction <maximumf>, %11, %cst_7 [1] : vector<8x8xf32> to vector<8xf32>
    %15 = vector.shape_cast %14 : vector<8xf32> to vector<8x1xf32>
    %16 = vector.broadcast %15 : vector<8x1xf32> to vector<8x8xf32>
    %17 = arith.cmpf oeq, %11, %16 : vector<8x8xf32>
    %c8_i32 = arith.constant 8 : i32
    %18 = vector.broadcast %c8_i32 : i32 to vector<8x8xi32>
    %19 = arith.select %17, %6, %18 : vector<8x8xi1>, vector<8x8xi32>
    %cst_8 = arith.constant dense<2147483647> : vector<8xi32>
    %20 = vector.multi_reduction <minsi>, %19, %cst_8 [1] : vector<8x8xi32> to vector<8xi32>
    %21 = vector.shape_cast %20 : vector<8xi32> to vector<8x1xi32>
    %22 = vector.broadcast %21 : vector<8x1xi32> to vector<8x8xi32>
    %23 = arith.cmpi eq, %6, %22 : vector<8x8xi32>
    %cst_9 = arith.constant 0xFF800000 : f32
    %24 = vector.broadcast %cst_9 : f32 to vector<8x8xf32>
    %25 = arith.select %23, %24, %11 : vector<8x8xi1>, vector<8x8xf32>
    %cst_10 = arith.constant dense<0xFF800000> : vector<8xf32>
    %26 = vector.multi_reduction <maximumf>, %25, %cst_10 [1] : vector<8x8xf32> to vector<8xf32>
    %27 = vector.shape_cast %26 : vector<8xf32> to vector<8x1xf32>
    %28 = vector.broadcast %27 : vector<8x1xf32> to vector<8x8xf32>
    %29 = arith.cmpf oeq, %25, %28 : vector<8x8xf32>
    %c8_i32_11 = arith.constant 8 : i32
    %30 = vector.broadcast %c8_i32_11 : i32 to vector<8x8xi32>
    %31 = arith.select %29, %6, %30 : vector<8x8xi1>, vector<8x8xi32>
    %cst_12 = arith.constant dense<2147483647> : vector<8xi32>
    %32 = vector.multi_reduction <minsi>, %31, %cst_12 [1] : vector<8x8xi32> to vector<8xi32>
    %33 = vector.shape_cast %32 : vector<8xi32> to vector<8x1xi32>
    %34 = tpu.concatenate %15, %27 in 1 : vector<8x1xf32>, vector<8x1xf32> -> vector<8x2xf32>
    %35 = tpu.concatenate %21, %33 in 1 : vector<8x1xi32>, vector<8x1xi32> -> vector<8x2xi32>
    %36 = vector.broadcast %13 : vector<8x1xf32> to vector<8x2xf32>
    %37 = arith.divf %34, %36 : vector<8x2xf32>
    %cst_13 = arith.constant 2.000000e+00 : f32
    %38 = vector.broadcast %cst_13 : f32 to vector<8x2xf32>
    %39 = arith.mulf %37, %38 : vector<8x2xf32>
    %40 = tpu.bitcast %39 : vector<8x2xf32> -> vector<8x2xi32>
    %c0_i32 = arith.constant 0 : i32
    %41 = vector.broadcast %c0_i32 : i32 to vector<8x62xi32>
    %42 = tpu.concatenate %40, %41, %35, %41 in 1 : vector<8x2xi32>, vector<8x62xi32>, vector<8x2xi32>, vector<8x62xi32> -> vector<8x128xi32>
    %c0_14 = arith.constant 0 : index
    %c0_15 = arith.constant 0 : index
    %43 = vector.load %arg4[%c0_14, %c0_15] : memref<8x128xi32, #tpu.memory_space<vmem>>, vector<8x128xi32>
    tpu.vector_store %arg4[%c0_14, %c0_15], %42 {strides = array<i32>} : memref<8x128xi32, #tpu.memory_space<vmem>>, vector<8x128xi32>,
    return
  }
  func.func @transform_0(%arg0: i32) -> (i32, i32) {
    %c0_i32 = arith.constant 0 : i32
    %c0_i32_0 = arith.constant 0 : i32
    return %arg0, %c0_i32 : i32, i32
  }
  func.func @transform_1(%arg0: i32) -> (i32, i32) {
    %c0_i32 = arith.constant 0 : i32
    %c0_i32_0 = arith.constant 0 : i32
    %c0_i32_1 = arith.constant 0 : i32
    return %c0_i32, %c0_i32_0 : i32, i32
  }
  func.func @transform_2(%arg0: i32) -> (i32, i32) {
    %c0_i32 = arith.constant 0 : i32
    %c0_i32_0 = arith.constant 0 : i32
    %c0_i32_1 = arith.constant 0 : i32
    return %c0_i32, %c0_i32_0 : i32, i32
  }
  func.func @transform_3(%arg0: i32) -> (i32, i32) {
    %c0_i32 = arith.constant 0 : i32
    %c0_i32_0 = arith.constant 0 : i32
    return %arg0, %c0_i32 : i32, i32
  }
}

</mosaic_0001>

<llo_original>
// kernel: tpu_custom_call.1
$region0: #{tpu_custom_call.1}
  #allocation0 [shape = 'u32[]', space=smem, size = 0x4, offset = 0x4, fixed_abs, tag = 'smem constant byte address 0x4 - core index']
  #allocation1 [shape = 'u32[144,128]{1,0:T(1,128)}', space=vmem, size = 0x12000, scoped, tag = 'internal scratch']
  %s0 = inlined_call_operand.vmem [shape: f32[16,32], index: 0, kind: input, shape index: {}]
  %s1 = inlined_call_operand.vmem [shape: f32[32,8], index: 1, kind: input, shape index: {}]
  %s2 = inlined_call_operand.vmem [shape: f32[1,8], index: 2, kind: input, shape index: {}]
  %s3 = inlined_call_operand.hbm [shape: s32[16,128], index: 3, kind: output, shape index: {}]
  %s4 = sld [smem:[#allocation0]]
  $region45: #{tpu_custom_call.1} parent=0
    _
  %s6 = ssub.s32 1, %s4
  %s7 = scalar_select 0, %s6, %s4
  $region1: #{tpu_custom_call.1} parent=0
    #allocation2 [shape = 'u8[8192]{0}', space=vmem, size = 0x2000, scoped, tag = 'output window, operand 0']
    #allocation3 [shape = 's32[2]{0}', space=sflag, size = 0x8, scoped, tag = 'scoped memory for tpu_custom_call.1']
    %8 = vsyncpa [#allocation3], 0
    %s9 = scalar_lea.sflag [#allocation3], 1
    %10 = vsyncpa %s9, 0
    loop: start=0, step=1, limit=4
    $region2: #{tpu_custom_call.1} parent=1 // loop_pre_header
      _
    $region3: #{tpu_custom_call.1} parent=1 // loop_header
      %s12 = sphi 0, %s16
      %p13 = scmp.ge.s32.totalorder %s12, 4
      %s22 = sphi 0, %s24
      %s25 = sphi 0, %s22
      %s26 = sphi 0, %s25
      %s42 = sphi 0, %s26
      %s46 = sphi 0, %s46
      %s48 = sphi 0, %s46
      %s49 = sphi 0, %s48
      %s63 = sphi 0, %s49
      %s67 = sphi 0, %s67
      %s69 = sphi 0, %s67
      %s70 = sphi 0, %s69
      %s84 = sphi 0, %s70
      %s90 = sphi 0, %s92
      %s93 = sphi 0, %s90
      %s94 = sphi 0, %s93
      %s110 = sphi 0, %s94
    $region4: #{tpu_custom_call.1} parent=1 // loop_header_branch
      %15 = sbr.rel (%p13) target = $region8
    $region5: #{tpu_custom_call.1} parent=1 // loop_body
      %s17 = ssub.s32 %s12, 1
      %s18 = ssub.s32 %s12, 2
      %s19 = sadd.s32 %s12, 1
      %s20 = ssub.s32 %s12, %s19
      %p21 = scmp.eq.s32.totalorder %s20, 0
      %s23 = sadd.s32 %s22, 1
      %s24 = scalar_select %p21, %s22, %s23
      %p27 = pneg %p21
      %p28 = scmp.eq.s32.totalorder %s12, 1
      %p29 = por %p27, %p28
      %p30 = scmp.ne.s32.totalorder %s22, %s25
      %p31 = scmp.eq.s32.totalorder %s12, 0
      %p32 = por %p30, %p31
      %p33 = scmp.ne.s32.totalorder %s22, %s25
      %p34 = scmp.eq.s32.totalorder %s17, 1
      %p35 = por %p33, %p34
      %p36 = scmp.ne.s32.totalorder %s25, %s26
      %p37 = scmp.eq.s32.totalorder %s17, 0
      %p38 = por %p36, %p37
      %p39 = scmp.ne.s32.totalorder %s25, %s26
      %p40 = scmp.eq.s32.totalorder %s18, 1
      %p41 = por %p39, %p40
      %p43 = scmp.ne.s32.totalorder %s26, %s42
      %p44 = scmp.eq.s32.totalorder %s18, 0
      %p45 = por %p43, %p44
      %s47 = sadd.s32 %s46, 1
      %p50 = scmp.eq.s32.totalorder %s12, 1
      %p51 = scmp.ne.s32.totalorder %s46, %s48
      %p52 = scmp.eq.s32.totalorder %s12, 0
      %p53 = por %p51, %p52
      %p54 = scmp.ne.s32.totalorder %s46, %s48
      %p55 = scmp.eq.s32.totalorder %s17, 1
      %p56 = por %p54, %p55
      %p57 = scmp.ne.s32.totalorder %s48, %s49
      %p58 = scmp.eq.s32.totalorder %s17, 0
      %p59 = por %p57, %p58
      %p60 = scmp.ne.s32.totalorder %s48, %s49
      %p61 = scmp.eq.s32.totalorder %s18, 1
      %p62 = por %p60, %p61
      %p64 = scmp.ne.s32.totalorder %s49, %s63
      %p65 = scmp.eq.s32.totalorder %s18, 0
      %p66 = por %p64, %p65
      %s68 = sadd.s32 %s67, 1
      %p71 = scmp.eq.s32.totalorder %s12, 1
      %p72 = scmp.ne.s32.totalorder %s67, %s69
      %p73 = scmp.eq.s32.totalorder %s12, 0
      %p74 = por %p72, %p73
      %p75 = scmp.ne.s32.totalorder %s67, %s69
      %p76 = scmp.eq.s32.totalorder %s17, 1
      %p77 = por %p75, %p76
      %p78 = scmp.ne.s32.totalorder %s69, %s70
      %p79 = scmp.eq.s32.totalorder %s17, 0
      %p80 = por %p78, %p79
      %p81 = scmp.ne.s32.totalorder %s69, %s70
      %p82 = scmp.eq.s32.totalorder %s18, 1
      %p83 = por %p81, %p82
      %p85 = scmp.ne.s32.totalorder %s70, %s84
      %p86 = scmp.eq.s32.totalorder %s18, 0
      %p87 = por %p85, %p86
      %s88 = ssub.s32 %s12, %s19
      %p89 = scmp.eq.s32.totalorder %s88, 0
      %s91 = sadd.s32 %s90, 1
      %s92 = scalar_select %p89, %s90, %s91
      %p95 = pneg %p89
      %p96 = scmp.eq.s32.totalorder %s12, 1
      %p97 = por %p95, %p96
      %p98 = scmp.ne.s32.totalorder %s90, %s93
      %p99 = scmp.eq.s32.totalorder %s12, 0
      %p100 = por %p98, %p99
      %p101 = scmp.ne.s32.totalorder %s90, %s93
      %p102 = scmp.eq.s32.totalorder %s17, 1
      %p103 = por %p101, %p102
      %p104 = scmp.ne.s32.totalorder %s93, %s94
      %p105 = scmp.eq.s32.totalorder %s17, 0
      %p106 = por %p104, %p105
      %p107 = scmp.ne.s32.totalorder %s93, %s94
      %p108 = scmp.eq.s32.totalorder %s18, 1
      %p109 = por %p107, %p108
      %p111 = scmp.ne.s32.totalorder %s94, %s110
      %p112 = scmp.eq.s32.totalorder %s18, 0
      %p113 = por %p111, %p112
      %p114 = scmp.le.s32.totalorder 1, %s12
      %p115 = scmp.lt.s32.totalorder %s12, 3
      %p116 = pnand %p114, %p115
      %p117 = pneg %p116
      // Predicated region
      $region9: #{tpu_custom_call.1} parent=5 // pred_check
        _
      $region10: #{tpu_custom_call.1} parent=5 // pred_check_branch
        %119 = sbr.rel (%p116) target = $region12
      $region11: #{tpu_custom_call.1} parent=5 // pred_region
        %s120 = ssub.s32 %s12, 1
        // Predicated region
        $region13: #{tpu_custom_call.1} parent=11 // pred_check
          %p121 = pneg %p59
        $region14: #{tpu_custom_call.1} parent=11 // pred_check_branch
          %123 = sbr.rel (%p121) target = $region16
        $region15: #{tpu_custom_call.1} parent=11 // pred_region
          _
        $region16: #{tpu_custom_call.1} parent=11 // pred_fallthru
          _
        // Predicated region
        $region17: #{tpu_custom_call.1} parent=11 // pred_check
          %p124 = pneg %p80
        $region18: #{tpu_custom_call.1} parent=11 // pred_check_branch
          %126 = sbr.rel (%p124) target = $region20
        $region19: #{tpu_custom_call.1} parent=11 // pred_region
          _
        $region20: #{tpu_custom_call.1} parent=11 // pred_fallthru
          _
      $region12: #{tpu_custom_call.1} parent=5 // pred_fallthru
        _
      %p127 = scmp.lt.s32.totalorder %s12, 2
      // Predicated region
      $region21: #{tpu_custom_call.1} parent=5 // pred_check
        %p128 = pneg %p127
      $region22: #{tpu_custom_call.1} parent=5 // pred_check_branch
        %130 = sbr.rel (%p128) target = $region24
      $region23: #{tpu_custom_call.1} parent=5 // pred_region
        // Predicated region
        $region25: #{tpu_custom_call.1} parent=23 // pred_check
          %p131 = pneg %p32
        $region26: #{tpu_custom_call.1} parent=23 // pred_check_branch
          %133 = sbr.rel (%p131) target = $region28
        $region27: #{tpu_custom_call.1} parent=23 // pred_region
          %p134 = scmp.lt.s32.totalorder %s12, 1
          %s135 = scalar_select %p134, %s12, 1
          %s136 = smul.addr %s135, 8
          %s137 = scalar_lea.vmem %s0, %s136
        $region28: #{tpu_custom_call.1} parent=23 // pred_fallthru
          _
      $region24: #{tpu_custom_call.1} parent=5 // pred_fallthru
        _
      %p138 = scmp.le.s32.totalorder 1, %s12
      %p139 = scmp.lt.s32.totalorder %s12, 3
      %p140 = pnand %p138, %p139
      %p141 = pneg %p140
      // Predicated region
      $region29: #{tpu_custom_call.1} parent=5 // pred_check
        _
      $region30: #{tpu_custom_call.1} parent=5 // pred_check_branch
        %143 = sbr.rel (%p140) target = $region32
      $region31: #{tpu_custom_call.1} parent=5 // pred_region
        %s144 = ssub.s32 %s12, 1
        %p145 = scmp.lt.s32.totalorder %s17, 1
        %s146 = scalar_select %p145, %s17, 1
        %s147 = smul.addr %s146, 8
        %s148 = scalar_lea.vmem %s0, %s147
        %p149 = pneg %p38
        %p150 = pneg %p35
        %p151 = pneg %p59
        %p152 = pneg %p56
        %p153 = pneg %p80
        %p154 = pneg %p77
        %p155 = pneg %p106
        %p156 = pneg %p103
        %s157 = sand.u32 %s93, 1
        %s158 = scalar_lea.sflag [#allocation3], %s157
        %s159 = sand.u32 %s93, 1
        %s160 = smul.addr %s159, 8
        %s161 = scalar_lea.vmem [#allocation2], %s160
        %p162 = scmp.lt.s32.totalorder %s17, 1
        %s163 = scalar_select %p162, %s17, 1
        %s164 = smul.addr %s163, 8
        %s165 = scalar_lea.vmem %s0, %s164
        %v166 = vld [vmem:[%s165] sm:$0xff]
        %v167 = vld [vmem:[%s1] sm:$0xff]
        %v168 = vld [vmem:[%s1 + $0x8] sm:$0xff]
        %v169 = vld [vmem:[%s1 + $0x10] sm:$0xff]
        %v170 = vld [vmem:[%s1 + $0x18] sm:$0xff]
        %v171 = vld [vmem:[%s2] sm:$0x1]
        %v173 = vlaneseq
        %v174 = vshrl.u32 %v173, 7
        %v175 = vsub.s32 0, %v174
        %v176 = vrot.slane %v171, %v175
        %vm178 = vcmask 261120
        %v180 = vsel %vm178, %v166, 0
        %182 = vmatprep.subr.mxu0 0.0
        %183 = vmatpush1.msra.mxu0 %v167
        %184 = vmatprep.subr.mxu0 0.0
        %185 = vmatpush1.msra.mxu0 %v168
        %186 = vmatprep.subr.mxu0 0.0
        %187 = vmatpush1.msra.mxu0 %v169
        %188 = vmatprep.subr.mxu0 0.0
        %189 = vmatpush1.msra.mxu0 %v170
        %190 = vmatprep.subr.mxu0 0.0
        %191 = vmatpush1.msra.mxu0 0.0
        %192 = vmatprep.subr.mxu0 0.0
        %193 = vmatpush1.msra.mxu0 0.0
        %194 = vmatprep.subr.mxu0 0.0
        %195 = vmatpush1.msra.mxu0 0.0
        %196 = vmatprep.subr.mxu0 0.0
        %197 = vmatpush1.msra.mxu0 0.0
        %198 = vmatprep.subr.mxu0 0.0
        %199 = vmatpush1.msra.mxu0 0.0
        %200 = vmatprep.subr.mxu0 0.0
        %201 = vmatpush1.msra.mxu0 0.0
        %202 = vmatprep.subr.mxu0 0.0
        %203 = vmatpush1.msra.mxu0 0.0
        %204 = vmatprep.subr.mxu0 0.0
        %205 = vmatpush1.msra.mxu0 0.0
        %206 = vmatprep.subr.mxu0 0.0
        %207 = vmatpush1.msra.mxu0 0.0
        %208 = vmatprep.subr.mxu0 0.0
        %209 = vmatpush1.msra.mxu0 0.0
        %210 = vmatprep.subr.mxu0 0.0
        %211 = vmatpush1.msra.mxu0 0.0
        %212 = vmatprep.subr.mxu0 0.0
        %213 = vmatpush1.msra.mxu0 0.0
        %214 = vmatprep.subr.mxu0 0.0
        %215 = vmatpush1.msra.mxu0 0.0
        %216 = vmatprep.subr.mxu0 0.0
        %217 = vmatpush1.msra.mxu0 0.0
        %218 = vmatprep.subr.mxu0 0.0
        %219 = vmatpush1.msra.mxu0 0.0
        %220 = vmatprep.subr.mxu0 0.0
        %221 = vmatpush1.msra.mxu0 0.0
        %222 = vmatprep.subr.mxu0 0.0
        %223 = vmatpush1.msra.mxu0 0.0
        %224 = vmatprep.subr.mxu0 0.0
        %225 = vmatpush1.msra.mxu0 0.0
        %226 = vmatprep.subr.mxu0 0.0
        %227 = vmatpush1.msra.mxu0 0.0
        %228 = vmatprep.subr.mxu0 0.0
        %229 = vmatpush1.msra.mxu0 0.0
        %230 = vmatprep.subr.mxu0 0.0
        %231 = vmatpush1.msra.mxu0 0.0
        %232 = vmatprep.subr.mxu0 0.0
        %233 = vmatpush1.msra.mxu0 0.0
        %234 = vmatprep.subr.mxu0 0.0
        %235 = vmatpush1.msra.mxu0 0.0
        %236 = vmatprep.subr.mxu0 0.0
        %237 = vmatpush1.msra.mxu0 0.0
        %238 = vmatprep.subr.mxu0 0.0
        %239 = vmatpush1.msra.mxu0 0.0
        %240 = vmatprep.subr.mxu0 0.0
        %241 = vmatpush1.msra.mxu0 0.0
        %242 = vmatprep.subr.mxu0 0.0
        %243 = vmatpush1.msra.mxu0 0.0
        %244 = vmatprep.subr.mxu0 0.0
        %245 = vmatpush1.msra.mxu0 0.0
        %246 = vmatprep.mubr.f32.mxu0 0.0
        %247 = vmatmul.mubr.f32.gmra.mrb[0].mxu0 %v180
        %v248 = vpop.f32.mrb[0].mxu0
        %v249 = vadd.f32 %v176, %v248
        %v250 = vpop.f32.mrb[0].mxu0
        %251 = vdwg.mxu0
        %v252 = vlaneseq
        %v253 = vand.u32 %v252, 127
        %vm254 = vcmask 64512
        %v255 = vsel %vm254, %v249, -inf
        %256 = vmax.xlane.f32.xlu0 %v255
        %v257 = vpop.xlane.xlu0 %256
        %v258 = vsub.f32 %v249, %v257
        %v259 = vmul.f32 %v258, 1.442695
        %v260 = vpow.pop %v259
        %v261 = vsel %vm254, %v260, 0.0
        %262 = vadd.xlane.f32.xlu0 %v261
        %v263 = vpop.xlane.xlu0 %262
        %v264 = vsel %vm254, %v260, -inf
        %265 = vmax.xlane.f32.xlu0 %v264
        %v266 = vpop.xlane.xlu0 %265
        %vm267 = vcmp.eq.f32.partialorder %v260, %v266
        %v268 = vsel %vm267, %v253, 8
        %v269 = vsel %vm254, %v268, 2147483647
        %v270 = vand.u32 %v269, 65535
        %v271 = vshra.s32 %v269, 16
        %v272 = vcvt.s32.f32 %v270
        %v273 = vcvt.s32.f32 %v271
        %274 = vmin.xlane.f32.xlu0 %v273
        %v275 = vpop.xlane.xlu0 %274
        %vm276 = vcmp.eq.f32.partialorder %v273, %v275
        %v277 = vsel %vm276, %v272, inf
        %278 = vmin.xlane.f32.xlu0 %v277
        %v279 = vpop.xlane.xlu0 %278
        %v280 = vcvt.f32.s32 %v279
        %v281 = vcvt.f32.s32 %v275
        %v282 = vshll.u32 %v281, 16
        %v283 = vadd.s32 %v282, %v280
        %vm284 = vcmp.eq.s32.totalorder %v253, %v283
        %v285 = vsel %vm284, -inf, %v260
        %v286 = vsel %vm254, %v285, -inf
        %287 = vmax.xlane.f32.xlu0 %v286
        %v288 = vpop.xlane.xlu0 %287
        %vm289 = vcmp.eq.f32.partialorder %v285, %v288
        %v290 = vsel %vm289, %v253, 8
        %v291 = vsel %vm254, %v290, 2147483647
        %v292 = vand.u32 %v291, 65535
        %v293 = vshra.s32 %v291, 16
        %v294 = vcvt.s32.f32 %v292
        %v295 = vcvt.s32.f32 %v293
        %296 = vmin.xlane.f32.xlu0 %v295
        %v297 = vpop.xlane.xlu0 %296
        %vm298 = vcmp.eq.f32.partialorder %v295, %v297
        %v299 = vsel %vm298, %v294, inf
        %300 = vmin.xlane.f32.xlu0 %v299
        %v301 = vpop.xlane.xlu0 %300
        %v302 = vcvt.f32.s32 %v301
        %v303 = vcvt.f32.s32 %v297
        %v304 = vshll.u32 %v303, 16
        %v305 = vadd.s32 %v304, %v302
        %vm306 = vcmask 7168
        %v307 = vsel %vm306, %v266, %v288
        %v308 = vsel %vm306, %v283, %v305
        %v309 = vrcp.pop %v263
        %v310 = vmul.f32 %v307, %v309
        %v311 = vmul.f32 %v310, 2.0
        %313 = vrot.lane.b32.xlu0 %v308, 64
        %v314 = vpop.permute.xlu0 %313
        %vm315 = vcmask 15360
        %v316 = vsel %vm315, %v311, 0
        %vm317 = vcmask 523264
        %v318 = vsel %vm317, %v316, %v314
        %vm319 = vcmask 539648
        %v320 = vsel %vm319, %v318, 0
        %321 = vst [vmem:[%s161] sm:$0xff] %v320
        %s322 = sand.u32 %s93, 1
        %s323 = scalar_lea.sflag [#allocation3], %s322
        %s324 = sand.u32 %s93, 1
        %s325 = smul.addr %s324, 8
        %s326 = scalar_lea.vmem [#allocation2], %s325
        // Predicated region
        $region33: #{tpu_custom_call.1} parent=31 // pred_check
          %p327 = pneg %p103
        $region34: #{tpu_custom_call.1} parent=31 // pred_check_branch
          %329 = sbr.rel (%p327) target = $region36
        $region35: #{tpu_custom_call.1} parent=31 // pred_region
          %s331 = ssub.s32 128, 128
          %332 = vsyncadd %s323, %s331
          %s333 = smul.addr %s17, 128
          %s334 = scalar_lea.hbm %s3, %s333
          %s336 = sshll.u32 %s326, 4
          %s337 = int_to_ptr.vmem [resolvable:$true] %s336
          %339 = dma.vmem_to_hbm [thread:$0]  %s337, 128, %s334, %s323
        $region36: #{tpu_custom_call.1} parent=31 // pred_fallthru
          _
      $region32: #{tpu_custom_call.1} parent=5 // pred_fallthru
        _
      %p340 = scmp.le.s32.totalorder 2, %s12
      // Predicated region
      $region37: #{tpu_custom_call.1} parent=5 // pred_check
        %p341 = pneg %p340
      $region38: #{tpu_custom_call.1} parent=5 // pred_check_branch
        %343 = sbr.rel (%p341) target = $region40
      $region39: #{tpu_custom_call.1} parent=5 // pred_region
        %s344 = ssub.s32 %s12, 2
        // Predicated region
        $region41: #{tpu_custom_call.1} parent=39 // pred_check
          %p345 = pneg %p109
        $region42: #{tpu_custom_call.1} parent=39 // pred_check_branch
          %347 = sbr.rel (%p345) target = $region44
        $region43: #{tpu_custom_call.1} parent=39 // pred_region
          %s348 = sand.u32 %s94, 1
          %s349 = scalar_lea.sflag [#allocation3], %s348
          %s350 = sand.u32 %s94, 1
          %s351 = smul.addr %s350, 8
          %s352 = scalar_lea.vmem [#allocation2], %s351
          %353 = dma.done %s349, 128
        $region44: #{tpu_custom_call.1} parent=39 // pred_fallthru
          _
      $region40: #{tpu_custom_call.1} parent=5 // pred_fallthru
        _
    $region6: #{tpu_custom_call.1} parent=1 // loop_footer
      %s16 = sadd.s32 1, %s12
    $region7: #{tpu_custom_call.1} parent=1 // loop_footer_branch
      %11 = sbr.rel target = $region3
    $region8: #{tpu_custom_call.1} parent=1 // loop_exit
      _
    %354 = vsyncpa [#allocation3], 1
    %s355 = scalar_lea.sflag [#allocation3], 1
    %356 = vsyncpa %s355, 1

</llo_original>
